<compile_context>
chip_gen: v7x
topology: tpu7x:2x2x1
jax: 0.10.0
libtpu: 0.0.40
codegen_flags: <defaults>
</compile_context>

<pallas_src>
import jax
import jax.numpy as jnp
from jax import lax
from jax.experimental import pallas as pl
from jax.experimental.pallas import tpu as pltpu


def _round_up(x, m):
    return ((x + m - 1) // m) * m


# -----------------------------------------------------------------------------
# Single fused kernel: gather top-K rows -> encode -> scatter back -> Gumbel-max
# categorical sample per row -> decoder GEMV -> L2 normalize.
# -----------------------------------------------------------------------------
def _fused_forward_kernel(x_ref,       # (L, C)   input_data (logit bank)
                          gath_ref,    # (Kp, L)  one-hot row-gather matrix
                          scat_ref,    # (L, Kp)  one-hot row-scatter matrix (gath.T)
                          w_in_ref,    # (C, Hp)  preprocess_input weight (H lane-padded)
                          b_in_ref,    # (1, Hp)
                          w_fca_ref,   # (Hp, C)  encoder_fc rows that hit input_embedding
                          b_fc_ref,    # (1, C)   encoder_fc bias + folded code contribution
                          gum_ref,     # (L, C)   precomputed Gumbel(0,1) noise
                          w_dec_ref,   # (L, Sp)  decoder weight (code_size lane-padded)
                          b_dec_ref,   # (1, Sp)
                          simu_ref,    # out (L, C)  simu_logit (rows[idx] replaced by enc)
                          out_ref):    # out (1, Sp) normalized decoder output
    x = x_ref[...]

    # --- encoder over the K selected rows, batched into one GEMM chain ---------
    cropped = jnp.dot(gath_ref[...], x, preferred_element_type=jnp.float32)      # (Kp, C)
    ie = jnp.maximum(
        jnp.dot(cropped, w_in_ref[...], preferred_element_type=jnp.float32)
        + b_in_ref[...], 0.0)                                                     # (Kp, Hp)
    enc = (jnp.dot(ie, w_fca_ref[...], preferred_element_type=jnp.float32)
           + b_fc_ref[...])                                                       # (Kp, C)

    # --- scatter encoder rows back: simu = input_data with rows[idx] = enc ------
    # (top_k indices are unique, so row_mask is exactly 0/1.)
    scat = scat_ref[...]
    row_mask = jnp.sum(scat, axis=1, keepdims=True)                               # (L, 1)
    simu = x * (1.0 - row_mask) + jnp.dot(scat, enc,
                                          preferred_element_type=jnp.float32)     # (L, C)
    simu_ref[...] = simu

    # --- Categorical(softmax(simu)).sample() == per-row argmax(simu + gumbel) ---
    z = simu + gum_ref[...]
    m = jnp.max(z, axis=1, keepdims=True)
    col = lax.broadcasted_iota(jnp.int32, z.shape, 1)
    sel = jnp.where(z >= m, col, z.shape[1])
    s = jnp.min(sel, axis=1, keepdims=True).astype(jnp.float32)                   # (L, 1)

    # --- decoder GEMV + F.normalize(dim=0) ---------------------------------------
    # The contraction is along the sublane axis; at a single fused grid step the
    # MXU already carries the four GEMMs above and this (L x Sp) broadcast-mul +
    # sublane reduce is negligible, so it stays on the VPU/XLU.
    v = jnp.sum(s * w_dec_ref[...], axis=0, keepdims=True) + b_dec_ref[...]       # (1, Sp)
    nrm = jnp.sqrt(jnp.sum(v * v, axis=1, keepdims=True))
    out_ref[...] = v / jnp.maximum(nrm, 1e-12)


def _forward_pallas(params, input_data, code, gumbel, top_k):
    """Runs the fused Pallas kernel. Returns (normalized output (code_size,),
    simu_logit (L, C) — the logit bank with the top-K rows replaced)."""
    w_in, b_in, w_code, b_code, w_fc, b_fc, w_dec, b_dec = params
    L, C = input_data.shape
    H = w_in.shape[1]
    S = w_dec.shape[1]
    K = int(top_k)

    # TODO(synk): the original `torch.topk(input_data, 100)` + `input_data[indexs]`
    # is shape-inconsistent (per-row top-k column indices reused as row indices);
    # we select the top-K *rows* by their max logit, which keeps the intended
    # "edit the top-K rows, scatter back, softmax-sample, decode" pipeline.
    scores = jnp.max(input_data, axis=1)
    _, indexs = lax.top_k(scores, K)
    indexs = indexs.astype(jnp.int32)

    # Fold the code-side contribution (identical for every selected row) into an
    # effective encoder_fc bias.
    code_emb = jnp.maximum(code.reshape(1, -1) @ w_code + b_code, 0.0)            # (1, H)
    b_fc_eff = code_emb @ w_fc[H:] + b_fc                                          # (1, C)

    # Lane-pad hidden (H) and code_size (S) to multiples of 128; sublane-pad K.
    Hp = _round_up(H, 128)
    Sp = _round_up(S, 128)
    Kp = _round_up(K, 8)

    w_in_p = jnp.pad(w_in, ((0, 0), (0, Hp - H)))                                  # (C, Hp)
    b_in_p = jnp.pad(b_in, ((0, 0), (0, Hp - H)))                                  # (1, Hp)
    w_fca_p = jnp.pad(w_fc[:H], ((0, Hp - H), (0, 0)))                             # (Hp, C)
    w_dec_p = jnp.pad(w_dec, ((0, 0), (0, Sp - S)))                                # (L, Sp)
    b_dec_p = jnp.pad(b_dec, ((0, 0), (0, Sp - S)))                                # (1, Sp)

    # One-hot gather/scatter matrices: the row gather and the row scatter become
    # MXU matmuls inside the kernel (no XLA scatter, no per-row DMAs).
    onehot = (jnp.arange(L)[:, None] == indexs[None, :]).astype(jnp.float32)       # (L, K)
    scat = jnp.pad(onehot, ((0, 0), (0, Kp - K)))                                  # (L, Kp)
    gath = scat.T                                                                  # (Kp, L)

    def full2d(shape):
        return pl.BlockSpec(shape, lambda i: (0, 0))

    cost = pl.CostEstimate(
        flops=int(2 * (Kp * L * C + Kp * C * Hp + Kp * Hp * C + L * Kp * C
                       + L * Sp) + 8 * L * C),
        transcendentals=0,
        bytes_accessed=int(4 * (3 * L * C + 2 * Kp * L + C * Hp + Hp * C
                                + 2 * Hp + 2 * C + L * Sp + 3 * Sp)),
    )

    simu, out_p = pl.pallas_call(
        _fused_forward_kernel,
        grid=(1,),
        in_specs=[
            full2d((L, C)),        # input_data
            full2d((Kp, L)),       # one-hot gather
            full2d((L, Kp)),       # one-hot scatter
            full2d((C, Hp)),       # w_in (padded)
            full2d((1, Hp)),       # b_in (padded)
            full2d((Hp, C)),       # w_fc input half (padded)
            full2d((1, C)),        # effective encoder_fc bias
            full2d((L, C)),        # gumbel noise
            full2d((L, Sp)),       # w_dec (padded)
            full2d((1, Sp)),       # b_dec (padded)
        ],
        out_specs=[full2d((L, C)), full2d((1, Sp))],
        out_shape=[jax.ShapeDtypeStruct((L, C), jnp.float32),
                   jax.ShapeDtypeStruct((1, Sp), jnp.float32)],
        compiler_params=pltpu.CompilerParams(
            dimension_semantics=("arbitrary",),
            vmem_limit_bytes=32 * 1024 * 1024),
        cost_estimate=cost,
    )(input_data, gath, scat, w_in_p, b_in_p, w_fca_p, b_fc_eff, gumbel,
      w_dec_p, b_dec_p)
    return out_p[0, :S], simu


# -----------------------------------------------------------------------------
# Full forward (Complete_process.forward)
# -----------------------------------------------------------------------------
def complete_process_forward(params, input_data, code, key,
                             d_constraint=6, top_k=100):
    del d_constraint  # unused by the reference forward's math (kept for fidelity)
    # Gumbel noise is generated with jax.random (pltpu.prng_seed has no lowering
    # on the CPU/interpret path); Gumbel-max on the logits is distribution-exact
    # Categorical(softmax(logits)) sampling.
    gumbel = jax.random.gumbel(key, input_data.shape, dtype=jnp.float32)
    out, _ = _forward_pallas(params, input_data, code, gumbel, top_k)
    return out


# Pure-JAX reference of the same forward (for deterministic checks).
def _forward_ref(params, input_data, code, gumbel, top_k):
    w_in, b_in, w_code, b_code, w_fc, b_fc, w_dec, b_dec = params
    H = w_in.shape[1]
    scores = jnp.max(input_data, axis=1)
    _, idxs = lax.top_k(scores, top_k)
    cropped = input_data[idxs]
    ie = jnp.maximum(cropped @ w_in + b_in, 0.0)
    ce = jnp.maximum(code.reshape(1, -1) @ w_code + b_code, 0.0)
    enc = ie @ w_fc[:H] + ce @ w_fc[H:] + b_fc
    simu = input_data.at[idxs].set(enc)
    s = jnp.argmax(simu + gumbel, axis=1).astype(jnp.float32)
    v = s @ w_dec + b_dec[0]
    out = v / jnp.maximum(jnp.linalg.norm(v), 1e-12)
    return out, simu


def init_params(key, input_size, code_size, hidden_size, output_length):
    """Kaiming-normal weights (nonlinearity='relu'), PyTorch-default biases."""
    def linear(k, fan_in, fan_out):
        kw, kb = jax.random.split(k)
        std = (2.0 / fan_in) ** 0.5
        w = std * jax.random.normal(kw, (fan_in, fan_out), dtype=jnp.float32)
        bound = 1.0 / (fan_in ** 0.5)
        b = jax.random.uniform(kb, (1, fan_out), minval=-bound, maxval=bound,
                               dtype=jnp.float32)
        return w, b

    k1, k2, k3, k4 = jax.random.split(key, 4)
    w_in, b_in = linear(k1, input_size, hidden_size)            # preprocess_input
    w_code, b_code = linear(k2, code_size, hidden_size)         # preprocess_code
    w_fc, b_fc = linear(k3, 2 * hidden_size, input_size)        # encoder_fc
    w_dec, b_dec = linear(k4, output_length, code_size)         # decoder
    return (w_in, b_in, w_code, b_code, w_fc, b_fc, w_dec, b_dec)


if __name__ == "__main__":
    # Small shapes consistent with the module (original: output_length=200,
    # hidden=64, top_k=100).
    input_size = 128
    output_length = 16
    hidden_size = 32
    code_size = 16
    top_k = 8
    d_constraint = 6

    key = jax.random.PRNGKey(0)
    kx, kc, kp, ks = jax.random.split(key, 4)
    input_data = jax.random.normal(kx, (output_length, input_size),
                                   dtype=jnp.float32)
    code = jax.random.normal(kc, (code_size,), dtype=jnp.float32)
    params = init_params(kp, input_size, code_size, hidden_size, output_length)
    w_dec, b_dec = params[6], params[7]

    # Full forward (stochastic categorical sample via Gumbel-max).
    out = complete_process_forward(params, input_data, code, key=ks,
                                   d_constraint=d_constraint, top_k=top_k)
    out = jax.block_until_ready(out)
    assert out.shape == (code_size,)
    assert bool(jnp.all(jnp.isfinite(out)))
    assert abs(float(jnp.linalg.norm(out)) - 1.0) < 1e-2     # F.normalize output

    # Deterministic check 1: simu_logit (encoder rows scattered back into the
    # logit bank) from the kernel vs a pure-JAX reference.
    gumbel = jax.random.gumbel(ks, input_data.shape, dtype=jnp.float32)
    out_k, simu_k = _forward_pallas(params, input_data, code, gumbel, top_k)
    out_k, simu_k = jax.block_until_ready((out_k, simu_k))
    _, simu_ref = _forward_ref(params, input_data, code, gumbel, top_k)
    assert jnp.allclose(simu_k, simu_ref, atol=5e-2, rtol=2e-2)

    # Deterministic check 2: sampling + decode + normalize, evaluated on the
    # kernel's own simu_logit so the argmax sees bit-identical operands.
    s_ref = jnp.argmax(simu_k + gumbel, axis=1).astype(jnp.float32)
    v_ref = s_ref @ w_dec + b_dec[0]
    ref_out = v_ref / jnp.maximum(jnp.linalg.norm(v_ref), 1e-12)
    assert jnp.allclose(out_k, ref_out, atol=2e-2, rtol=2e-2)

    print("KERNEL_OK")
</pallas_src>

<mosaic_0001>
module attributes {stable_mosaic.version = 11 : i64} {
  func.func @_fused_forward_kernel(%arg0: i32, %arg1: memref<16x128xf32, #tpu.memory_space<vmem>>, %arg2: memref<8x16xf32, #tpu.memory_space<vmem>>, %arg3: memref<16x8xf32, #tpu.memory_space<vmem>>, %arg4: memref<128x128xf32, #tpu.memory_space<vmem>>, %arg5: memref<1x128xf32, #tpu.memory_space<vmem>>, %arg6: memref<128x128xf32, #tpu.memory_space<vmem>>, %arg7: memref<1x128xf32, #tpu.memory_space<vmem>>, %arg8: memref<16x128xf32, #tpu.memory_space<vmem>>, %arg9: memref<16x128xf32, #tpu.memory_space<vmem>>, %arg10: memref<1x128xf32, #tpu.memory_space<vmem>>, %arg11: memref<16x128xf32, #tpu.memory_space<vmem>>, %arg12: memref<1x128xf32, #tpu.memory_space<vmem>>) attributes {dimension_semantics = [#tpu.dimension_semantics<arbitrary>], iteration_bounds = array<i64: 1>, scalar_prefetch = 0 : i64, scratch_operands = 0 : i64, tpu.core_type = #tpu.core_type<tc>, window_params = [{pipeline_mode = #tpu.pipeline_mode<synchronous>, transform_indices = @transform_0, window_bounds = array<i64: 16, 128>}, {pipeline_mode = #tpu.pipeline_mode<synchronous>, transform_indices = @transform_1, window_bounds = array<i64: 8, 16>}, {pipeline_mode = #tpu.pipeline_mode<synchronous>, transform_indices = @transform_2, window_bounds = array<i64: 16, 8>}, {pipeline_mode = #tpu.pipeline_mode<synchronous>, transform_indices = @transform_3, window_bounds = array<i64: 128, 128>}, {pipeline_mode = #tpu.pipeline_mode<synchronous>, transform_indices = @transform_4, window_bounds = array<i64: 1, 128>}, {pipeline_mode = #tpu.pipeline_mode<synchronous>, transform_indices = @transform_5, window_bounds = array<i64: 128, 128>}, {pipeline_mode = #tpu.pipeline_mode<synchronous>, transform_indices = @transform_6, window_bounds = array<i64: 1, 128>}, {pipeline_mode = #tpu.pipeline_mode<synchronous>, transform_indices = @transform_7, window_bounds = array<i64: 16, 128>}, {pipeline_mode = #tpu.pipeline_mode<synchronous>, transform_indices = @transform_8, window_bounds = array<i64: 16, 128>}, {pipeline_mode = #tpu.pipeline_mode<synchronous>, transform_indices = @transform_9, window_bounds = array<i64: 1, 128>}, {pipeline_mode = #tpu.pipeline_mode<synchronous>, transform_indices = @transform_10, window_bounds = array<i64: 16, 128>}, {pipeline_mode = #tpu.pipeline_mode<synchronous>, transform_indices = @transform_11, window_bounds = array<i64: 1, 128>}]} {
    %c0 = arith.constant 0 : index
    %c0_0 = arith.constant 0 : index
    %0 = vector.load %arg1[%c0, %c0_0] : memref<16x128xf32, #tpu.memory_space<vmem>>, vector<16x128xf32>
    %c0_1 = arith.constant 0 : index
    %c0_2 = arith.constant 0 : index
    %1 = vector.load %arg2[%c0_1, %c0_2] : memref<8x16xf32, #tpu.memory_space<vmem>>, vector<8x16xf32>
    %cst = arith.constant dense<0.000000e+00> : vector<8x128xf32>
    %2 = tpu.matmul %1, %0, %cst {dimension_numbers = #tpu.dot_dimension_numbers<[1], [0], [0], [1], [0, 0, 1, 1], [], []>} : vector<8x16xf32>, vector<16x128xf32>, vector<8x128xf32> -> vector<8x128xf32>
    %c0_3 = arith.constant 0 : index
    %c0_4 = arith.constant 0 : index
    %3 = vector.load %arg4[%c0_3, %c0_4] : memref<128x128xf32, #tpu.memory_space<vmem>>, vector<128x128xf32>
    %cst_5 = arith.constant dense<0.000000e+00> : vector<8x128xf32>
    %4 = tpu.matmul %2, %3, %cst_5 {dimension_numbers = #tpu.dot_dimension_numbers<[1], [0], [0], [1], [0, 0, 1, 1], [], []>} : vector<8x128xf32>, vector<128x128xf32>, vector<8x128xf32> -> vector<8x128xf32>
    %c0_6 = arith.constant 0 : index
    %c0_7 = arith.constant 0 : index
    %5 = vector.load %arg5[%c0_6, %c0_7] : memref<1x128xf32, #tpu.memory_space<vmem>>, vector<1x128xf32>
    %6 = vector.broadcast %5 : vector<1x128xf32> to vector<8x128xf32>
    %7 = arith.addf %4, %6 : vector<8x128xf32>
    %cst_8 = arith.constant 0.000000e+00 : f32
    %8 = vector.broadcast %cst_8 : f32 to vector<8x128xf32>
    %9 = arith.maximumf %7, %8 : vector<8x128xf32>
    %c0_9 = arith.constant 0 : index
    %c0_10 = arith.constant 0 : index
    %10 = vector.load %arg6[%c0_9, %c0_10] : memref<128x128xf32, #tpu.memory_space<vmem>>, vector<128x128xf32>
    %cst_11 = arith.constant dense<0.000000e+00> : vector<8x128xf32>
    %11 = tpu.matmul %9, %10, %cst_11 {dimension_numbers = #tpu.dot_dimension_numbers<[1], [0], [0], [1], [0, 0, 1, 1], [], []>} : vector<8x128xf32>, vector<128x128xf32>, vector<8x128xf32> -> vector<8x128xf32>
    %c0_12 = arith.constant 0 : index
    %c0_13 = arith.constant 0 : index
    %12 = vector.load %arg7[%c0_12, %c0_13] : memref<1x128xf32, #tpu.memory_space<vmem>>, vector<1x128xf32>
    %13 = vector.broadcast %12 : vector<1x128xf32> to vector<8x128xf32>
    %14 = arith.addf %11, %13 : vector<8x128xf32>
    %c0_14 = arith.constant 0 : index
    %c0_15 = arith.constant 0 : index
    %15 = vector.load %arg3[%c0_14, %c0_15] : memref<16x8xf32, #tpu.memory_space<vmem>>, vector<16x8xf32>
    %cst_16 = arith.constant dense<0.000000e+00> : vector<16xf32>
    %16 = vector.multi_reduction <add>, %15, %cst_16 [1] : vector<16x8xf32> to vector<16xf32>
    %17 = vector.shape_cast %16 : vector<16xf32> to vector<16x1xf32>
    %cst_17 = arith.constant 1.000000e+00 : f32
    %18 = vector.broadcast %cst_17 : f32 to vector<16x1xf32>
    %19 = arith.subf %18, %17 : vector<16x1xf32>
    %20 = vector.broadcast %19 : vector<16x1xf32> to vector<16x128xf32>
    %21 = arith.mulf %0, %20 : vector<16x128xf32>
    %cst_18 = arith.constant dense<0.000000e+00> : vector<16x128xf32>
    %22 = tpu.matmul %15, %14, %cst_18 {dimension_numbers = #tpu.dot_dimension_numbers<[1], [0], [0], [1], [0, 0, 1, 1], [], []>} : vector<16x8xf32>, vector<8x128xf32>, vector<16x128xf32> -> vector<16x128xf32>
    %23 = arith.addf %21, %22 : vector<16x128xf32>
    %c0_19 = arith.constant 0 : index
    %c0_20 = arith.constant 0 : index
    %24 = vector.load %arg11[%c0_19, %c0_20] : memref<16x128xf32, #tpu.memory_space<vmem>>, vector<16x128xf32>
    tpu.vector_store %arg11[%c0_19, %c0_20], %23 {strides = array<i32>} : memref<16x128xf32, #tpu.memory_space<vmem>>, vector<16x128xf32>,
    %c0_21 = arith.constant 0 : index
    %c0_22 = arith.constant 0 : index
    %25 = vector.load %arg8[%c0_21, %c0_22] : memref<16x128xf32, #tpu.memory_space<vmem>>, vector<16x128xf32>
    %26 = arith.addf %23, %25 : vector<16x128xf32>
    %cst_23 = arith.constant dense<0xFF800000> : vector<16xf32>
    %27 = vector.multi_reduction <maximumf>, %26, %cst_23 [1] : vector<16x128xf32> to vector<16xf32>
    %28 = vector.shape_cast %27 : vector<16xf32> to vector<16x1xf32>
    %29 = tpu.iota {dimensions = array<i32: 1>} : vector<16x128xi32>
    %30 = vector.broadcast %28 : vector<16x1xf32> to vector<16x128xf32>
    %31 = arith.cmpf oge, %26, %30 : vector<16x128xf32>
    %c128_i32 = arith.constant 128 : i32
    %32 = vector.broadcast %c128_i32 : i32 to vector<16x128xi32>
    %33 = arith.select %31, %29, %32 : vector<16x128xi1>, vector<16x128xi32>
    %cst_24 = arith.constant dense<2147483647> : vector<16xi32>
    %34 = vector.multi_reduction <minsi>, %33, %cst_24 [1] : vector<16x128xi32> to vector<16xi32>
    %35 = vector.shape_cast %34 : vector<16xi32> to vector<16x1xi32>
    %36 = arith.sitofp %35 : vector<16x1xi32> to vector<16x1xf32>
    %c0_25 = arith.constant 0 : index
    %c0_26 = arith.constant 0 : index
    %37 = vector.load %arg9[%c0_25, %c0_26] : memref<16x128xf32, #tpu.memory_space<vmem>>, vector<16x128xf32>
    %38 = vector.broadcast %36 : vector<16x1xf32> to vector<16x128xf32>
    %39 = arith.mulf %38, %37 : vector<16x128xf32>
    %cst_27 = arith.constant dense<0.000000e+00> : vector<128xf32>
    %40 = vector.multi_reduction <add>, %39, %cst_27 [0] : vector<16x128xf32> to vector<128xf32>
    %41 = vector.shape_cast %40 : vector<128xf32> to vector<1x128xf32>
    %c0_28 = arith.constant 0 : index
    %c0_29 = arith.constant 0 : index
    %42 = vector.load %arg10[%c0_28, %c0_29] : memref<1x128xf32, #tpu.memory_space<vmem>>, vector<1x128xf32>
    %43 = arith.addf %41, %42 : vector<1x128xf32>
    %44 = arith.mulf %43, %43 : vector<1x128xf32>
    %cst_30 = arith.constant dense<0.000000e+00> : vector<1xf32>
    %45 = vector.multi_reduction <add>, %44, %cst_30 [1] : vector<1x128xf32> to vector<1xf32>
    %46 = vector.shape_cast %45 : vector<1xf32> to vector<1x1xf32>
    %47 = math.sqrt %46 : vector<1x1xf32>
    %cst_31 = arith.constant 9.99999996E-13 : f32
    %48 = vector.broadcast %cst_31 : f32 to vector<1x1xf32>
    %49 = arith.maximumf %47, %48 : vector<1x1xf32>
    %50 = vector.broadcast %49 : vector<1x1xf32> to vector<1x128xf32>
    %51 = arith.divf %43, %50 : vector<1x128xf32>
    %c0_32 = arith.constant 0 : index
    %c0_33 = arith.constant 0 : index
    %52 = vector.load %arg12[%c0_32, %c0_33] : memref<1x128xf32, #tpu.memory_space<vmem>>, vector<1x128xf32>
    tpu.vector_store %arg12[%c0_32, %c0_33], %51 {strides = array<i32>} : memref<1x128xf32, #tpu.memory_space<vmem>>, vector<1x128xf32>,
    return
  }
  func.func @transform_0(%arg0: i32) -> (i32, i32) {
    %c0_i32 = arith.constant 0 : i32
    %c0_i32_0 = arith.constant 0 : i32
    %c0_i32_1 = arith.constant 0 : i32
    return %c0_i32, %c0_i32_0 : i32, i32
  }
  func.func @transform_1(%arg0: i32) -> (i32, i32) {
    %c0_i32 = arith.constant 0 : i32
    %c0_i32_0 = arith.constant 0 : i32
    %c0_i32_1 = arith.constant 0 : i32
    return %c0_i32, %c0_i32_0 : i32, i32
  }
  func.func @transform_2(%arg0: i32) -> (i32, i32) {
    %c0_i32 = arith.constant 0 : i32
    %c0_i32_0 = arith.constant 0 : i32
    %c0_i32_1 = arith.constant 0 : i32
    return %c0_i32, %c0_i32_0 : i32, i32
  }
  func.func @transform_3(%arg0: i32) -> (i32, i32) {
    %c0_i32 = arith.constant 0 : i32
    %c0_i32_0 = arith.constant 0 : i32
    %c0_i32_1 = arith.constant 0 : i32
    return %c0_i32, %c0_i32_0 : i32, i32
  }
  func.func @transform_4(%arg0: i32) -> (i32, i32) {
    %c0_i32 = arith.constant 0 : i32
    %c0_i32_0 = arith.constant 0 : i32
    %c0_i32_1 = arith.constant 0 : i32
    return %c0_i32, %c0_i32_0 : i32, i32
  }
  func.func @transform_5(%arg0: i32) -> (i32, i32) {
    %c0_i32 = arith.constant 0 : i32
    %c0_i32_0 = arith.constant 0 : i32
    %c0_i32_1 = arith.constant 0 : i32
    return %c0_i32, %c0_i32_0 : i32, i32
  }
  func.func @transform_6(%arg0: i32) -> (i32, i32) {
    %c0_i32 = arith.constant 0 : i32
    %c0_i32_0 = arith.constant 0 : i32
    %c0_i32_1 = arith.constant 0 : i32
    return %c0_i32, %c0_i32_0 : i32, i32
  }
  func.func @transform_7(%arg0: i32) -> (i32, i32) {
    %c0_i32 = arith.constant 0 : i32
    %c0_i32_0 = arith.constant 0 : i32
    %c0_i32_1 = arith.constant 0 : i32
    return %c0_i32, %c0_i32_0 : i32, i32
  }
  func.func @transform_8(%arg0: i32) -> (i32, i32) {
    %c0_i32 = arith.constant 0 : i32
    %c0_i32_0 = arith.constant 0 : i32
    %c0_i32_1 = arith.constant 0 : i32
    return %c0_i32, %c0_i32_0 : i32, i32
  }
  func.func @transform_9(%arg0: i32) -> (i32, i32) {
    %c0_i32 = arith.constant 0 : i32
    %c0_i32_0 = arith.constant 0 : i32
    %c0_i32_1 = arith.constant 0 : i32
    return %c0_i32, %c0_i32_0 : i32, i32
  }
  func.func @transform_10(%arg0: i32) -> (i32, i32) {
    %c0_i32 = arith.constant 0 : i32
    %c0_i32_0 = arith.constant 0 : i32
    %c0_i32_1 = arith.constant 0 : i32
    return %c0_i32, %c0_i32_0 : i32, i32
  }
  func.func @transform_11(%arg0: i32) -> (i32, i32) {
    %c0_i32 = arith.constant 0 : i32
    %c0_i32_0 = arith.constant 0 : i32
    %c0_i32_1 = arith.constant 0 : i32
    return %c0_i32, %c0_i32_0 : i32, i32
  }
}

</mosaic_0001>

<llo_original>
// kernel: tpu_custom_call.1
$region0: #{tpu_custom_call.1}
  #allocation0 [shape = 'u32[]', space=smem, size = 0x4, offset = 0x4, fixed_abs, tag = 'smem constant byte address 0x4 - core index']
  #allocation1 [shape = 'u32[144,128]{1,0:T(1,128)}', space=vmem, size = 0x12000, scoped, tag = 'internal scratch']
  %s0 = inlined_call_operand.vmem [shape: f32[16,128], index: 0, kind: input, shape index: {}]
  %s1 = inlined_call_operand.hbm [shape: f32[8,16], index: 1, kind: input, shape index: {}]
  %s2 = inlined_call_operand.vmem [shape: f32[16,8], index: 2, kind: input, shape index: {}]
  %s3 = inlined_call_operand.hbm [shape: f32[128,128], index: 3, kind: input, shape index: {}]
  %s4 = inlined_call_operand.vmem [shape: f32[1,128], index: 4, kind: input, shape index: {}]
  %s5 = inlined_call_operand.hbm [shape: f32[128,128], index: 5, kind: input, shape index: {}]
  %s6 = inlined_call_operand.vmem [shape: f32[1,128], index: 6, kind: input, shape index: {}]
  %s7 = inlined_call_operand.vmem [shape: f32[16,128], index: 7, kind: input, shape index: {}]
  %s8 = inlined_call_operand.vmem [shape: f32[16,128], index: 8, kind: input, shape index: {}]
  %s9 = inlined_call_operand.vmem [shape: f32[1,128], index: 9, kind: input, shape index: {}]
  %s10 = inlined_call_operand.hbm [shape: f32[16,128], index: 10, kind: output, shape index: {0}]
  %s11 = inlined_call_operand.hbm [shape: f32[1,128], index: 11, kind: output, shape index: {1}]
  %12 = xla_tuple %s10, %s11
  %s13 = sld [smem:[#allocation0]]
  $region70: #{tpu_custom_call.1} parent=0
    _
  %s15 = ssub.s32 1, %s13
  %s16 = scalar_select 0, %s15, %s13
  $region1: #{tpu_custom_call.1} parent=0
    #allocation2 [shape = 'u8[4096]{0}', space=vmem, size = 0x1000, scoped, tag = 'input window, operand 1, single buffered']
    #allocation3 [shape = 's32[1]{0}', space=sflag, size = 0x4, scoped, tag = 'scoped memory for tpu_custom_call.1']
    #allocation4 [shape = 's32[1]{0}', space=sflag, size = 0x4, scoped, tag = 'scoped memory for tpu_custom_call.1']
    #allocation5 [shape = 'u8[65536]{0}', space=vmem, size = 0x10000, scoped, tag = 'input window, operand 3, single buffered']
    #allocation6 [shape = 's32[1]{0}', space=sflag, size = 0x4, scoped, tag = 'scoped memory for tpu_custom_call.1']
    #allocation7 [shape = 'u8[65536]{0}', space=vmem, size = 0x10000, scoped, tag = 'input window, operand 5, single buffered']
    #allocation8 [shape = 'u8[8192]{0}', space=vmem, size = 0x2000, scoped, tag = 'output window, operand 0, single buffered']
    #allocation9 [shape = 'u8[512]{0}', space=vmem, size = 0x400, scoped, tag = 'output window, operand 1, single buffered']
    #allocation10 [shape = 's32[1]{0}', space=sflag, size = 0x4, scoped, tag = 'scoped memory for tpu_custom_call.1']
    %17 = vsyncpa [#allocation3], 0
    %18 = vsyncpa [#allocation6], 0
    %19 = vsyncpa [#allocation4], 0
    %20 = vsyncpa [#allocation10], 0
    // Predicated region
    $region2: #{tpu_custom_call.1} parent=1 // pred_check
      _
    $region3: #{tpu_custom_call.1} parent=1 // pred_check_branch
      %22 = sbr.rel (0) target = $region5
    $region4: #{tpu_custom_call.1} parent=1 // pred_region
      _
    $region5: #{tpu_custom_call.1} parent=1 // pred_fallthru
      _
    // Predicated region
    $region6: #{tpu_custom_call.1} parent=1 // pred_check
      _
    $region7: #{tpu_custom_call.1} parent=1 // pred_check_branch
      %24 = sbr.rel (0) target = $region9
    $region8: #{tpu_custom_call.1} parent=1 // pred_region
      %s26 = ssub.s32 128, 128
      %27 = vsyncadd [#allocation3], %s26
      %s29 = sshll.u32 [#allocation2], 4
      %s30 = int_to_ptr.vmem [resolvable:$true] %s29
      %32 = dma.hbm_to_vmem [thread:$0]  %s1, 128, %s30, [#allocation3]
    $region9: #{tpu_custom_call.1} parent=1 // pred_fallthru
      _
    // Predicated region
    $region10: #{tpu_custom_call.1} parent=1 // pred_check
      _
    $region11: #{tpu_custom_call.1} parent=1 // pred_check_branch
      %34 = sbr.rel (0) target = $region13
    $region12: #{tpu_custom_call.1} parent=1 // pred_region
      _
    $region13: #{tpu_custom_call.1} parent=1 // pred_fallthru
      _
    // Predicated region
    $region14: #{tpu_custom_call.1} parent=1 // pred_check
      _
    $region15: #{tpu_custom_call.1} parent=1 // pred_check_branch
      %36 = sbr.rel (0) target = $region17
    $region16: #{tpu_custom_call.1} parent=1 // pred_region
      %s38 = ssub.s32 2048, 2048
      %39 = vsyncadd [#allocation6], %s38
      %s40 = sshll.u32 [#allocation5], 4
      %s41 = int_to_ptr.vmem [resolvable:$true] %s40
      %46 = dma.hbm_to_vmem [thread:$0]  %s3, 2048, %s41, [#allocation6], 128, 128, 8
    $region17: #{tpu_custom_call.1} parent=1 // pred_fallthru
      _
    // Predicated region
    $region18: #{tpu_custom_call.1} parent=1 // pred_check
      _
    $region19: #{tpu_custom_call.1} parent=1 // pred_check_branch
      %48 = sbr.rel (0) target = $region21
    $region20: #{tpu_custom_call.1} parent=1 // pred_region
      _
    $region21: #{tpu_custom_call.1} parent=1 // pred_fallthru
      _
    // Predicated region
    $region22: #{tpu_custom_call.1} parent=1 // pred_check
      _
    $region23: #{tpu_custom_call.1} parent=1 // pred_check_branch
      %50 = sbr.rel (0) target = $region25
    $region24: #{tpu_custom_call.1} parent=1 // pred_region
      %s52 = ssub.s32 2048, 2048
      %53 = vsyncadd [#allocation6], %s52
      %s54 = sshll.u32 [#allocation7], 4
      %s55 = int_to_ptr.vmem [resolvable:$true] %s54
      %60 = dma.hbm_to_vmem [thread:$0]  %s5, 2048, %s55, [#allocation6], 128, 128, 8
    $region25: #{tpu_custom_call.1} parent=1 // pred_fallthru
      _
    // Predicated region
    $region26: #{tpu_custom_call.1} parent=1 // pred_check
      _
    $region27: #{tpu_custom_call.1} parent=1 // pred_check_branch
      %62 = sbr.rel (0) target = $region29
    $region28: #{tpu_custom_call.1} parent=1 // pred_region
      _
    $region29: #{tpu_custom_call.1} parent=1 // pred_fallthru
      _
    // Predicated region
    $region30: #{tpu_custom_call.1} parent=1 // pred_check
      _
    $region31: #{tpu_custom_call.1} parent=1 // pred_check_branch
      %64 = sbr.rel (0) target = $region33
    $region32: #{tpu_custom_call.1} parent=1 // pred_region
      _
    $region33: #{tpu_custom_call.1} parent=1 // pred_fallthru
      _
    // Predicated region
    $region34: #{tpu_custom_call.1} parent=1 // pred_check
      _
    $region35: #{tpu_custom_call.1} parent=1 // pred_check_branch
      %66 = sbr.rel (0) target = $region37
    $region36: #{tpu_custom_call.1} parent=1 // pred_region
      _
    $region37: #{tpu_custom_call.1} parent=1 // pred_fallthru
      _
    // Predicated region
    $region38: #{tpu_custom_call.1} parent=1 // pred_check
      _
    $region39: #{tpu_custom_call.1} parent=1 // pred_check_branch
      %68 = sbr.rel (0) target = $region41
    $region40: #{tpu_custom_call.1} parent=1 // pred_region
      _
    $region41: #{tpu_custom_call.1} parent=1 // pred_fallthru
      _
    // Predicated region
    $region42: #{tpu_custom_call.1} parent=1 // pred_check
      _
    $region43: #{tpu_custom_call.1} parent=1 // pred_check_branch
      %70 = sbr.rel (0) target = $region45
    $region44: #{tpu_custom_call.1} parent=1 // pred_region
      %71 = dma.done [#allocation3], 128
    $region45: #{tpu_custom_call.1} parent=1 // pred_fallthru
      _
    // Predicated region
    $region46: #{tpu_custom_call.1} parent=1 // pred_check
      _
    $region47: #{tpu_custom_call.1} parent=1 // pred_check_branch
      %73 = sbr.rel (0) target = $region49
    $region48: #{tpu_custom_call.1} parent=1 // pred_region
      %74 = dma.done [#allocation6], 2048
    $region49: #{tpu_custom_call.1} parent=1 // pred_fallthru
      _
    // Predicated region
    $region50: #{tpu_custom_call.1} parent=1 // pred_check
      _
    $region51: #{tpu_custom_call.1} parent=1 // pred_check_branch
      %76 = sbr.rel (0) target = $region53
    $region52: #{tpu_custom_call.1} parent=1 // pred_region
      %77 = dma.done [#allocation6], 2048
    $region53: #{tpu_custom_call.1} parent=1 // pred_fallthru
      _
    %v78 = vld [vmem:[%s0] sm:$0xff]
    %v79 = vld [vmem:[%s0 + $0x8] sm:$0xff]
    %v80 = vld [vmem:[#allocation2] sm:$0xff]
    %vm81 = vcmask 130048
    %v83 = vsel %vm81, %v80, 0
    %85 = vmatprep.subr.mxu0 0.0
    %86 = vmatpush1.msra.mxu0 %v78
    %87 = vmatprep.subr.mxu0 0.0
    %88 = vmatpush1.msra.mxu0 %v79
    %89 = vmatprep.subr.mxu0 0.0
    %90 = vmatpush1.msra.mxu0 0.0
    %91 = vmatprep.subr.mxu0 0.0
    %92 = vmatpush1.msra.mxu0 0.0
    %93 = vmatprep.subr.mxu0 0.0
    %94 = vmatpush1.msra.mxu0 0.0
    %95 = vmatprep.subr.mxu0 0.0
    %96 = vmatpush1.msra.mxu0 0.0
    %97 = vmatprep.subr.mxu0 0.0
    %98 = vmatpush1.msra.mxu0 0.0
    %99 = vmatprep.subr.mxu0 0.0
    %100 = vmatpush1.msra.mxu0 0.0
    %101 = vmatprep.subr.mxu0 0.0
    %102 = vmatpush1.msra.mxu0 0.0
    %103 = vmatprep.subr.mxu0 0.0
    %104 = vmatpush1.msra.mxu0 0.0
    %105 = vmatprep.subr.mxu0 0.0
    %106 = vmatpush1.msra.mxu0 0.0
    %107 = vmatprep.subr.mxu0 0.0
    %108 = vmatpush1.msra.mxu0 0.0
    %109 = vmatprep.subr.mxu0 0.0
    %110 = vmatpush1.msra.mxu0 0.0
    %111 = vmatprep.subr.mxu0 0.0
    %112 = vmatpush1.msra.mxu0 0.0
    %113 = vmatprep.subr.mxu0 0.0
    %114 = vmatpush1.msra.mxu0 0.0
    %115 = vmatprep.subr.mxu0 0.0
    %116 = vmatpush1.msra.mxu0 0.0
    %117 = vmatprep.subr.mxu0 0.0
    %118 = vmatpush1.msra.mxu0 0.0
    %119 = vmatprep.subr.mxu0 0.0
    %120 = vmatpush1.msra.mxu0 0.0
    %121 = vmatprep.subr.mxu0 0.0
    %122 = vmatpush1.msra.mxu0 0.0
    %123 = vmatprep.subr.mxu0 0.0
    %124 = vmatpush1.msra.mxu0 0.0
    %125 = vmatprep.subr.mxu0 0.0
    %126 = vmatpush1.msra.mxu0 0.0
    %127 = vmatprep.subr.mxu0 0.0
    %128 = vmatpush1.msra.mxu0 0.0
    %129 = vmatprep.subr.mxu0 0.0
    %130 = vmatpush1.msra.mxu0 0.0
    %131 = vmatprep.subr.mxu0 0.0
    %132 = vmatpush1.msra.mxu0 0.0
    %133 = vmatprep.subr.mxu0 0.0
    %134 = vmatpush1.msra.mxu0 0.0
    %135 = vmatprep.subr.mxu0 0.0
    %136 = vmatpush1.msra.mxu0 0.0
    %137 = vmatprep.subr.mxu0 0.0
    %138 = vmatpush1.msra.mxu0 0.0
    %139 = vmatprep.subr.mxu0 0.0
    %140 = vmatpush1.msra.mxu0 0.0
    %141 = vmatprep.subr.mxu0 0.0
    %142 = vmatpush1.msra.mxu0 0.0
    %143 = vmatprep.subr.mxu0 0.0
    %144 = vmatpush1.msra.mxu0 0.0
    %145 = vmatprep.subr.mxu0 0.0
    %146 = vmatpush1.msra.mxu0 0.0
    %147 = vmatprep.subr.mxu0 0.0
    %148 = vmatpush1.msra.mxu0 0.0
    %149 = vmatprep.mubr.f32.mxu0 0.0
    %150 = vmatmul.mubr.f32.gmra.mrb[0].mxu0 %v83
    %v151 = vpop.f32.mrb[0].mxu0
    %v152 = vadd.f32 0.0, %v151
    %v153 = vpop.f32.mrb[0].mxu0
    %154 = vdwg.mxu0
    %v155 = vld [vmem:[#allocation5] sm:$0xff]
    %v156 = vld [vmem:[#allocation5 + $0x8] sm:$0xff]
    %v157 = vld [vmem:[#allocation5 + $0x10] sm:$0xff]
    %v158 = vld [vmem:[#allocation5 + $0x18] sm:$0xff]
    %v159 = vld [vmem:[#allocation5 + $0x20] sm:$0xff]
    %v160 = vld [vmem:[#allocation5 + $0x28] sm:$0xff]
    %v161 = vld [vmem:[#allocation5 + $0x30] sm:$0xff]
    %v162 = vld [vmem:[#allocation5 + $0x38] sm:$0xff]
    %v163 = vld [vmem:[#allocation5 + $0x40] sm:$0xff]
    %v164 = vld [vmem:[#allocation5 + $0x48] sm:$0xff]
    %v165 = vld [vmem:[#allocation5 + $0x50] sm:$0xff]
    %v166 = vld [vmem:[#allocation5 + $0x58] sm:$0xff]
    %v167 = vld [vmem:[#allocation5 + $0x60] sm:$0xff]
    %v168 = vld [vmem:[#allocation5 + $0x68] sm:$0xff]
    %v169 = vld [vmem:[#allocation5 + $0x70] sm:$0xff]
    %v170 = vld [vmem:[#allocation5 + $0x78] sm:$0xff]
    %v171 = vld [vmem:[%s4] sm:$0x1]
    %v173 = vlaneseq
    %v174 = vshrl.u32 %v173, 7
    %v175 = vsub.s32 0, %v174
    %v176 = vrot.slane %v171, %v175
    %178 = vmatprep.subr.mxu0 0.0
    %179 = vmatpush1.msra.mxu0 %v155
    %180 = vmatprep.subr.mxu0 0.0
    %181 = vmatpush1.msra.mxu0 %v156
    %182 = vmatprep.subr.mxu0 0.0
    %183 = vmatpush1.msra.mxu0 %v157
    %184 = vmatprep.subr.mxu0 0.0
    %185 = vmatpush1.msra.mxu0 %v158
    %186 = vmatprep.subr.mxu0 0.0
    %187 = vmatpush1.msra.mxu0 %v159
    %188 = vmatprep.subr.mxu0 0.0
    %189 = vmatpush1.msra.mxu0 %v160
    %190 = vmatprep.subr.mxu0 0.0
    %191 = vmatpush1.msra.mxu0 %v161
    %192 = vmatprep.subr.mxu0 0.0
    %193 = vmatpush1.msra.mxu0 %v162
    %194 = vmatprep.subr.mxu0 0.0
    %195 = vmatpush1.msra.mxu0 %v163
    %196 = vmatprep.subr.mxu0 0.0
    %197 = vmatpush1.msra.mxu0 %v164
    %198 = vmatprep.subr.mxu0 0.0
    %199 = vmatpush1.msra.mxu0 %v165
    %200 = vmatprep.subr.mxu0 0.0
    %201 = vmatpush1.msra.mxu0 %v166
    %202 = vmatprep.subr.mxu0 0.0
    %203 = vmatpush1.msra.mxu0 %v167
    %204 = vmatprep.subr.mxu0 0.0
    %205 = vmatpush1.msra.mxu0 %v168
    %206 = vmatprep.subr.mxu0 0.0
    %207 = vmatpush1.msra.mxu0 %v169
    %208 = vmatprep.subr.mxu0 0.0
    %209 = vmatpush1.msra.mxu0 %v170
    %210 = vmatprep.subr.mxu0 0.0
    %211 = vmatpush1.msra.mxu0 0.0
    %212 = vmatprep.subr.mxu0 0.0
    %213 = vmatpush1.msra.mxu0 0.0
    %214 = vmatprep.subr.mxu0 0.0
    %215 = vmatpush1.msra.mxu0 0.0
    %216 = vmatprep.subr.mxu0 0.0
    %217 = vmatpush1.msra.mxu0 0.0
    %218 = vmatprep.subr.mxu0 0.0
    %219 = vmatpush1.msra.mxu0 0.0
    %220 = vmatprep.subr.mxu0 0.0
    %221 = vmatpush1.msra.mxu0 0.0
    %222 = vmatprep.subr.mxu0 0.0
    %223 = vmatpush1.msra.mxu0 0.0
    %224 = vmatprep.subr.mxu0 0.0
    %225 = vmatpush1.msra.mxu0 0.0
    %226 = vmatprep.subr.mxu0 0.0
    %227 = vmatpush1.msra.mxu0 0.0
    %228 = vmatprep.subr.mxu0 0.0
    %229 = vmatpush1.msra.mxu0 0.0
    %230 = vmatprep.subr.mxu0 0.0
    %231 = vmatpush1.msra.mxu0 0.0
    %232 = vmatprep.subr.mxu0 0.0
    %233 = vmatpush1.msra.mxu0 0.0
    %234 = vmatprep.subr.mxu0 0.0
    %235 = vmatpush1.msra.mxu0 0.0
    %236 = vmatprep.subr.mxu0 0.0
    %237 = vmatpush1.msra.mxu0 0.0
    %238 = vmatprep.subr.mxu0 0.0
    %239 = vmatpush1.msra.mxu0 0.0
    %240 = vmatprep.subr.mxu0 0.0
    %241 = vmatpush1.msra.mxu0 0.0
    %242 = vmatprep.mubr.f32.mxu0 0.0
    %243 = vmatmul.mubr.f32.gmra.mrb[0].mxu0 %v152
    %v244 = vpop.f32.mrb[0].mxu0
    %v245 = vadd.f32 %v176, %v244
    %v246 = vpop.f32.mrb[0].mxu0
    %247 = vdwg.mxu0
    %v248 = vmax.f32 %v245, 0.0
    %v249 = vld [vmem:[#allocation7] sm:$0xff]
    %v250 = vld [vmem:[#allocation7 + $0x8] sm:$0xff]
    %v251 = vld [vmem:[#allocation7 + $0x10] sm:$0xff]
    %v252 = vld [vmem:[#allocation7 + $0x18] sm:$0xff]
    %v253 = vld [vmem:[#allocation7 + $0x20] sm:$0xff]
    %v254 = vld [vmem:[#allocation7 + $0x28] sm:$0xff]
    %v255 = vld [vmem:[#allocation7 + $0x30] sm:$0xff]
    %v256 = vld [vmem:[#allocation7 + $0x38] sm:$0xff]
    %v257 = vld [vmem:[#allocation7 + $0x40] sm:$0xff]
    %v258 = vld [vmem:[#allocation7 + $0x48] sm:$0xff]
    %v259 = vld [vmem:[#allocation7 + $0x50] sm:$0xff]
    %v260 = vld [vmem:[#allocation7 + $0x58] sm:$0xff]
    %v261 = vld [vmem:[#allocation7 + $0x60] sm:$0xff]
    %v262 = vld [vmem:[#allocation7 + $0x68] sm:$0xff]
    %v263 = vld [vmem:[#allocation7 + $0x70] sm:$0xff]
    %v264 = vld [vmem:[#allocation7 + $0x78] sm:$0xff]
    %v265 = vld [vmem:[%s6] sm:$0x1]
    %v267 = vlaneseq
    %v268 = vshrl.u32 %v267, 7
    %v269 = vsub.s32 0, %v268
    %v270 = vrot.slane %v265, %v269
    %272 = vmatprep.subr.mxu0 0.0
    %273 = vmatpush1.msra.mxu0 %v249
    %274 = vmatprep.subr.mxu0 0.0
    %275 = vmatpush1.msra.mxu0 %v250
    %276 = vmatprep.subr.mxu0 0.0
    %277 = vmatpush1.msra.mxu0 %v251
    %278 = vmatprep.subr.mxu0 0.0
    %279 = vmatpush1.msra.mxu0 %v252
    %280 = vmatprep.subr.mxu0 0.0
    %281 = vmatpush1.msra.mxu0 %v253
    %282 = vmatprep.subr.mxu0 0.0
    %283 = vmatpush1.msra.mxu0 %v254
    %284 = vmatprep.subr.mxu0 0.0
    %285 = vmatpush1.msra.mxu0 %v255
    %286 = vmatprep.subr.mxu0 0.0
    %287 = vmatpush1.msra.mxu0 %v256
    %288 = vmatprep.subr.mxu0 0.0
    %289 = vmatpush1.msra.mxu0 %v257
    %290 = vmatprep.subr.mxu0 0.0
    %291 = vmatpush1.msra.mxu0 %v258
    %292 = vmatprep.subr.mxu0 0.0
    %293 = vmatpush1.msra.mxu0 %v259
    %294 = vmatprep.subr.mxu0 0.0
    %295 = vmatpush1.msra.mxu0 %v260
    %296 = vmatprep.subr.mxu0 0.0
    %297 = vmatpush1.msra.mxu0 %v261
    %298 = vmatprep.subr.mxu0 0.0
    %299 = vmatpush1.msra.mxu0 %v262
    %300 = vmatprep.subr.mxu0 0.0
    %301 = vmatpush1.msra.mxu0 %v263
    %302 = vmatprep.subr.mxu0 0.0
    %303 = vmatpush1.msra.mxu0 %v264
    %304 = vmatprep.subr.mxu0 0.0
    %305 = vmatpush1.msra.mxu0 0.0
    %306 = vmatprep.subr.mxu0 0.0
    %307 = vmatpush1.msra.mxu0 0.0
    %308 = vmatprep.subr.mxu0 0.0
    %309 = vmatpush1.msra.mxu0 0.0
    %310 = vmatprep.subr.mxu0 0.0
    %311 = vmatpush1.msra.mxu0 0.0
    %312 = vmatprep.subr.mxu0 0.0
    %313 = vmatpush1.msra.mxu0 0.0
    %314 = vmatprep.subr.mxu0 0.0
    %315 = vmatpush1.msra.mxu0 0.0
    %316 = vmatprep.subr.mxu0 0.0
    %317 = vmatpush1.msra.mxu0 0.0
    %318 = vmatprep.subr.mxu0 0.0
    %319 = vmatpush1.msra.mxu0 0.0
    %320 = vmatprep.subr.mxu0 0.0
    %321 = vmatpush1.msra.mxu0 0.0
    %322 = vmatprep.subr.mxu0 0.0
    %323 = vmatpush1.msra.mxu0 0.0
    %324 = vmatprep.subr.mxu0 0.0
    %325 = vmatpush1.msra.mxu0 0.0
    %326 = vmatprep.subr.mxu0 0.0
    %327 = vmatpush1.msra.mxu0 0.0
    %328 = vmatprep.subr.mxu0 0.0
    %329 = vmatpush1.msra.mxu0 0.0
    %330 = vmatprep.subr.mxu0 0.0
    %331 = vmatpush1.msra.mxu0 0.0
    %332 = vmatprep.subr.mxu0 0.0
    %333 = vmatpush1.msra.mxu0 0.0
    %334 = vmatprep.subr.mxu0 0.0
    %335 = vmatpush1.msra.mxu0 0.0
    %336 = vmatprep.mubr.f32.mxu0 0.0
    %337 = vmatmul.mubr.f32.gmra.mrb[0].mxu0 %v248
    %v338 = vpop.f32.mrb[0].mxu0
    %v339 = vadd.f32 %v270, %v338
    %v340 = vpop.f32.mrb[0].mxu0
    %341 = vdwg.mxu0
    %v342 = vld [vmem:[%s2] sm:$0xff]
    %v343 = vld [vmem:[%s2 + $0x8] sm:$0xff]
    %vm344 = vcmask 64512
    %v345 = vsel %vm344, %v342, 0.0
    %346 = vadd.xlane.f32.xlu0 %v345
    %v347 = vpop.xlane.xlu0 %346
    %v348 = vsel %vm344, %v343, 0.0
    %349 = vadd.xlane.f32.xlu0 %v348
    %v350 = vpop.xlane.xlu0 %349
    %v351 = vsub.f32 1.0, %v347
    %v352 = vsub.f32 1.0, %v350
    %v353 = vmul.f32 %v78, %v351
    %v354 = vmul.f32 %v79, %v352
    %v356 = vsel %vm344, %v342, 0
    %v359 = vsel %vm344, %v343, 0
    %361 = vmatprep.subr.mxu0 0.0
    %362 = vmatpush1.msra.mxu0 %v339
    %363 = vmatprep.subr.mxu0 0.0
    %364 = vmatpush1.msra.mxu0 0.0
    %365 = vmatprep.subr.mxu0 0.0
    %366 = vmatpush1.msra.mxu0 0.0
    %367 = vmatprep.subr.mxu0 0.0
    %368 = vmatpush1.msra.mxu0 0.0
    %369 = vmatprep.subr.mxu0 0.0
    %370 = vmatpush1.msra.mxu0 0.0
    %371 = vmatprep.subr.mxu0 0.0
    %372 = vmatpush1.msra.mxu0 0.0
    %373 = vmatprep.subr.mxu0 0.0
    %374 = vmatpush1.msra.mxu0 0.0
    %375 = vmatprep.subr.mxu0 0.0
    %376 = vmatpush1.msra.mxu0 0.0
    %377 = vmatprep.subr.mxu0 0.0
    %378 = vmatpush1.msra.mxu0 0.0
    %379 = vmatprep.subr.mxu0 0.0
    %380 = vmatpush1.msra.mxu0 0.0
    %381 = vmatprep.subr.mxu0 0.0
    %382 = vmatpush1.msra.mxu0 0.0
    %383 = vmatprep.subr.mxu0 0.0
    %384 = vmatpush1.msra.mxu0 0.0
    %385 = vmatprep.subr.mxu0 0.0
    %386 = vmatpush1.msra.mxu0 0.0
    %387 = vmatprep.subr.mxu0 0.0
    %388 = vmatpush1.msra.mxu0 0.0
    %389 = vmatprep.subr.mxu0 0.0
    %390 = vmatpush1.msra.mxu0 0.0
    %391 = vmatprep.subr.mxu0 0.0
    %392 = vmatpush1.msra.mxu0 0.0
    %393 = vmatprep.subr.mxu0 0.0
    %394 = vmatpush1.msra.mxu0 0.0
    %395 = vmatprep.subr.mxu0 0.0
    %396 = vmatpush1.msra.mxu0 0.0
    %397 = vmatprep.subr.mxu0 0.0
    %398 = vmatpush1.msra.mxu0 0.0
    %399 = vmatprep.subr.mxu0 0.0
    %400 = vmatpush1.msra.mxu0 0.0
    %401 = vmatprep.subr.mxu0 0.0
    %402 = vmatpush1.msra.mxu0 0.0
    %403 = vmatprep.subr.mxu0 0.0
    %404 = vmatpush1.msra.mxu0 0.0
    %405 = vmatprep.subr.mxu0 0.0
    %406 = vmatpush1.msra.mxu0 0.0
    %407 = vmatprep.subr.mxu0 0.0
    %408 = vmatpush1.msra.mxu0 0.0
    %409 = vmatprep.subr.mxu0 0.0
    %410 = vmatpush1.msra.mxu0 0.0
    %411 = vmatprep.subr.mxu0 0.0
    %412 = vmatpush1.msra.mxu0 0.0
    %413 = vmatprep.subr.mxu0 0.0
    %414 = vmatpush1.msra.mxu0 0.0
    %415 = vmatprep.subr.mxu0 0.0
    %416 = vmatpush1.msra.mxu0 0.0
    %417 = vmatprep.subr.mxu0 0.0
    %418 = vmatpush1.msra.mxu0 0.0
    %419 = vmatprep.subr.mxu0 0.0
    %420 = vmatpush1.msra.mxu0 0.0
    %421 = vmatprep.subr.mxu0 0.0
    %422 = vmatpush1.msra.mxu0 0.0
    %423 = vmatprep.subr.mxu0 0.0
    %424 = vmatpush1.msra.mxu0 0.0
    %425 = vmatprep.mubr.f32.mxu0 0.0
    %426 = vmatmul.mubr.f32.gmra.mrb[0].mxu0 %v356
    %v427 = vpop.f32.mrb[0].mxu0
    %v428 = vadd.f32 0.0, %v427
    %v429 = vpop.f32.mrb[0].mxu0
    %430 = vmatprep.mubr.f32.mxu0 0.0
    %431 = vmatmul.mubr.f32.gmra.mrb[0].mxu0 %v359
    %v432 = vpop.f32.mrb[0].mxu0
    %v433 = vadd.f32 0.0, %v432
    %v434 = vpop.f32.mrb[0].mxu0
    %435 = vdwg.mxu0
    %v436 = vadd.f32 %v353, %v428
    %v437 = vadd.f32 %v354, %v433
    %438 = vst [vmem:[#allocation8] sm:$0xff] %v436
    %439 = vst [vmem:[#allocation8 + $0x8] sm:$0xff] %v437
    %v440 = vld [vmem:[%s7] sm:$0xff]
    %v441 = vld [vmem:[%s7 + $0x8] sm:$0xff]
    %v442 = vadd.f32 %v436, %v440
    %v443 = vadd.f32 %v437, %v441
    %444 = vmax.xlane.f32.xlu0 %v442
    %v445 = vpop.xlane.xlu0 %444
    %446 = vmax.xlane.f32.xlu0 %v443
    %v447 = vpop.xlane.xlu0 %446
    %v448 = vlaneseq
    %v449 = vand.u32 %v448, 127
    %vm450 = vcmp.ge.f32.partialorder %v442, %v445
    %vm451 = vcmp.ge.f32.partialorder %v443, %v447
    %v452 = vsel %vm450, %v449, 128
    %v453 = vsel %vm451, %v449, 128
    %v454 = vand.u32 %v452, 65535
    %v455 = vshra.s32 %v452, 16
    %v456 = vcvt.s32.f32 %v454
    %v457 = vcvt.s32.f32 %v455
    %458 = vmin.xlane.f32.xlu0 %v457
    %v459 = vpop.xlane.xlu0 %458
    %vm460 = vcmp.eq.f32.partialorder %v457, %v459
    %v461 = vsel %vm460, %v456, inf
    %462 = vmin.xlane.f32.xlu0 %v461
    %v463 = vpop.xlane.xlu0 %462
    %v464 = vcvt.f32.s32 %v463
    %v465 = vcvt.f32.s32 %v459
    %v466 = vshll.u32 %v465, 16
    %v467 = vadd.s32 %v466, %v464
    %v468 = vand.u32 %v453, 65535
    %v469 = vshra.s32 %v453, 16
    %v470 = vcvt.s32.f32 %v468
    %v471 = vcvt.s32.f32 %v469
    %472 = vmin.xlane.f32.xlu0 %v471
    %v473 = vpop.xlane.xlu0 %472
    %vm474 = vcmp.eq.f32.partialorder %v471, %v473
    %v475 = vsel %vm474, %v470, inf
    %476 = vmin.xlane.f32.xlu0 %v475
    %v477 = vpop.xlane.xlu0 %476
    %v478 = vcvt.f32.s32 %v477
    %v479 = vcvt.f32.s32 %v473
    %v480 = vshll.u32 %v479, 16
    %v481 = vadd.s32 %v480, %v478
    %v482 = vcvt.s32.f32 %v467
    %v483 = vcvt.s32.f32 %v481
    %v484 = vld [vmem:[%s8] sm:$0xff]
    %v485 = vld [vmem:[%s8 + $0x8] sm:$0xff]
    %v486 = vmul.f32 %v482, %v484
    %v487 = vmul.f32 %v483, %v485
    %v488 = vadd.f32 %v486, %v487
    %v489 = vrot.slane %v488, 4
    %v490 = vadd.f32 %v488, %v489
    %v491 = vrot.slane %v490, 2
    %v492 = vadd.f32 %v490, %v491
    %v493 = vrot.slane %v492, 1
    %v494 = vadd.f32 %v492, %v493
    %v495 = vld [vmem:[%s9] sm:$0x1]
    %v496 = vadd.f32 %v494, %v495
    %v497 = vmul.f32 %v496, %v496
    %vm498 = vcmask 1040384
    %v499 = vsel %vm498, %v497, 0.0
    %500 = vadd.xlane.f32.xlu0 %v499
    %v501 = vpop.xlane.xlu0 %500
    %v502 = vrsqrt.pop %v501
    %v503 = vmul.f32 %v501, %v502
    %vm504 = vcmp.eq.f32.partialorder %v501, inf
    %v505 = vsel %vm504, %v501, %v503
    %vm506 = vcmp.eq.f32.partialorder %v501, 0.0
    %v507 = vand.u32 %v501, 2147483648
    %v508 = vsel %vm506, %v507, %v505
    %v509 = vmax.f32 %v508, 1e-12
    %v510 = vrcp.pop %v509
    %v511 = vmul.f32 %v496, %v510
    %512 = vst [vmem:[#allocation9] sm:$0x1] %v511
    // Predicated region
    $region54: #{tpu_custom_call.1} parent=1 // pred_check
      _
    $region55: #{tpu_custom_call.1} parent=1 // pred_check_branch
      %514 = sbr.rel (0) target = $region57
    $region56: #{tpu_custom_call.1} parent=1 // pred_region
      %s516 = ssub.s32 256, 256
      %517 = vsyncadd [#allocation4], %s516
      %s518 = sshll.u32 [#allocation8], 4
      %s519 = int_to_ptr.vmem [resolvable:$true] %s518
      %524 = dma.vmem_to_hbm [thread:$0]  %s519, 256, %s10, [#allocation4], 128, 128, 8
    $region57: #{tpu_custom_call.1} parent=1 // pred_fallthru
      _
    // Predicated region
    $region58: #{tpu_custom_call.1} parent=1 // pred_check
      _
    $region59: #{tpu_custom_call.1} parent=1 // pred_check_branch
      %526 = sbr.rel (0) target = $region61
    $region60: #{tpu_custom_call.1} parent=1 // pred_region
      %s528 = ssub.s32 16, 16
      %529 = vsyncadd [#allocation10], %s528
      %s531 = sshll.u32 [#allocation9], 4
      %s532 = int_to_ptr.vmem [resolvable:$true] %s531
      %534 = dma.vmem_to_hbm [thread:$0]  %s532, 16, %s11, [#allocation10]
    $region61: #{tpu_custom_call.1} parent=1 // pred_fallthru
      _
    // Predicated region
    $region62: #{tpu_custom_call.1} parent=1 // pred_check
      _
    $region63: #{tpu_custom_call.1} parent=1 // pred_check_branch
      %536 = sbr.rel (0) target = $region65
    $region64: #{tpu_custom_call.1} parent=1 // pred_region
      %537 = dma.done [#allocation4], 256
    $region65: #{tpu_custom_call.1} parent=1 // pred_fallthru
      _
    // Predicated region
    $region66: #{tpu_custom_call.1} parent=1 // pred_check
      _
    $region67: #{tpu_custom_call.1} parent=1 // pred_check_branch
      %539 = sbr.rel (0) target = $region69
    $region68: #{tpu_custom_call.1} parent=1 // pred_region
      %540 = dma.done [#allocation10], 16
    $region69: #{tpu_custom_call.1} parent=1 // pred_fallthru
      _
    %541 = vsyncpa [#allocation3], 1
    %542 = vsyncpa [#allocation6], 1
    %543 = vsyncpa [#allocation4], 1
    %544 = vsyncpa [#allocation10], 1

</llo_original>
